<compile_context>
chip_gen: v7x
topology: tpu7x:2x2x1
jax: 0.10.0
libtpu: 0.0.40
codegen_flags: <defaults>
</compile_context>

<pallas_src>
import functools

import jax
import jax.numpy as jnp
from jax.experimental import pallas as pl
from jax.experimental.pallas import tpu as pltpu


def _conv_relu_kernel(x_ref, w_ref, o_ref, slab_ref, *, C_in, KH, KW,
                      dilation, Wp, Mw, apply_relu):
    """One padded sample -> conv + fused ReLU as a single implicit GEMM.

    x_ref:    (C_in, Hp*Wp + tail)  bf16  flattened padded sample (W on lanes)
    w_ref:    (C_out, K)            bf16  weight, K = KH*KW*C_in, grid-invariant
    o_ref:    (C_out, Mw)           f32   lane-dense "wide" output, Mw = HO*Wp
    slab_ref: (K, Mw)               bf16  VMEM scratch holding the im2col slab
    """
    # Build the (K, Mw) im2col slab: for tap (kh, kw), wide-output column
    # m = ho*Wp + wo needs flat element m + dilation*(kh*Wp + kw), so each tap
    # is ONE contiguous static lane slice of the flat image.
    for kh in range(KH):
        for kw in range(KW):
            off = dilation * (kh * Wp + kw)
            idx = kh * KW + kw
            slab_ref[idx * C_in:(idx + 1) * C_in, :] = x_ref[:, off:off + Mw]

    # Single MXU GEMM, contraction depth K = KH*KW*C_in, f32 accumulation.
    acc = jnp.dot(w_ref[...], slab_ref[...], preferred_element_type=jnp.float32)
    if apply_relu:
        acc = jnp.maximum(acc, 0.0)          # lane-dense VPU ReLU, no transpose
    o_ref[...] = acc.astype(o_ref.dtype)     # lane-dense store (Mw >= 128 lanes)


@functools.partial(jax.jit,
                   static_argnames=("stride", "padding", "dilation", "activation"))
def conv2d_activa_forward(x, weight, *, stride=1, padding=0, dilation=1,
                          activation="relu"):
    """Forward pass of Conv2D_activa.

    x:      (N, C_in, H, W)       float32 (NCHW, PyTorch convention)
    weight: (C_out, C_in, KH, KW) float32 (PyTorch Conv2d OIHW layout, no bias)
    """
    N, C_in, H, W = x.shape
    C_out, C_in_w, KH, KW = weight.shape
    if C_in_w != C_in:
        raise ValueError(f"weight C_in {C_in_w} != input C_in {C_in}")
    if activation == "relu":
        apply_relu = True
    elif activation in (None, False, 0, ""):
        apply_relu = False
    else:
        raise ValueError(f"unsupported activation: {activation!r}")
    if padding and (padding > H - 1 or padding > W - 1):
        raise ValueError("ReflectionPad2d requires padding <= dim - 1")

    # Reflection pad in the wrapper (fuses with the flatten + bf16 cast below).
    x_p = x
    if padding:
        x_p = jnp.pad(
            x, ((0, 0), (0, 0), (padding, padding), (padding, padding)),
            mode="reflect")
    Hp, Wp = H + 2 * padding, W + 2 * padding

    # Dense (stride-1) output extent; stride handled by subsampling below.
    HO = Hp - dilation * (KH - 1)
    WO = Wp - dilation * (KW - 1)
    Mw = HO * Wp                       # "wide" GEMM columns (full row pitch)
    tail = dilation * (KW - 1)         # keeps the widest tap slice in bounds
    Lflat = Hp * Wp + tail

    # NCHW sample flattened so W sits on the lane axis; bf16 for the MXU.
    x_flat = jnp.pad(x_p.reshape(N, C_in, Hp * Wp),
                     ((0, 0), (0, 0), (0, tail))).astype(jnp.bfloat16)

    # Weight -> (C_out, K) with K ordered (kh, kw, ci) to match the slab rows.
    K = KH * KW * C_in
    w2 = (jnp.transpose(weight, (0, 2, 3, 1))
          .reshape(C_out, K)
          .astype(jnp.bfloat16))

    kernel = functools.partial(
        _conv_relu_kernel, C_in=C_in, KH=KH, KW=KW, dilation=dilation,
        Wp=Wp, Mw=Mw, apply_relu=apply_relu)

    out_wide = pl.pallas_call(
        kernel,
        out_shape=jax.ShapeDtypeStruct((N, C_out, Mw), jnp.float32),
        grid=(N,),
        in_specs=[
            # One flattened padded sample per grid step (batch dim squeezed).
            pl.BlockSpec((None, C_in, Lflat), lambda n: (n, 0, 0)),
            # Full weight; constant index map -> re-fetch is skipped across
            # steps (single-buffering it via pl.Buffered(1) is optional headroom).
            pl.BlockSpec((C_out, K), lambda n: (0, 0)),
        ],
        out_specs=pl.BlockSpec((None, C_out, Mw), lambda n: (n, 0, 0)),
        scratch_shapes=[pltpu.VMEM((K, Mw), jnp.bfloat16)],
        compiler_params=pltpu.CompilerParams(
            dimension_semantics=("parallel",),
            vmem_limit_bytes=32 * 1024 * 1024),
    )(x_flat, w2)

    # Wide -> compact: drop the (Wp - WO) garbage columns per output row.
    out = out_wide.reshape(N, C_out, HO, Wp)[:, :, :, :WO]
    if stride > 1:
        # TODO(synk): fold stride into the kernel's slab slices (strided pl.ds)
        # to avoid stride^2 extra MXU work; the module under test uses stride=1.
        out = out[:, :, ::stride, ::stride]
    return out.astype(x.dtype)          # (N, C_out, H_out, W_out), NCHW


def _reference_forward(x, weight, *, stride, padding, dilation):
    """Pure-JAX reference (lax conv) for correctness checking."""
    x_pad = x
    if padding:
        x_pad = jnp.pad(
            x, ((0, 0), (0, 0), (padding, padding), (padding, padding)),
            mode="reflect")
    out = jax.lax.conv_general_dilated(
        x_pad, weight,
        window_strides=(stride, stride),
        padding="VALID",
        rhs_dilation=(dilation, dilation),
        dimension_numbers=("NCHW", "OIHW", "NCHW"),
        preferred_element_type=jnp.float32)
    return jnp.maximum(out, 0.0)


if __name__ == "__main__":
    # Conv2D_activa(in_channels=4, out_channels=8, kernel_size=3, stride=1,
    #               padding=1, dilation=1, activation='relu')
    N, C_in, H, W = 2, 4, 16, 16
    C_out, KH, KW = 8, 3, 3
    stride, padding, dilation = 1, 1, 1

    key = jax.random.PRNGKey(0)
    kx, kw = jax.random.split(key)
    x = jax.random.normal(kx, (N, C_in, H, W), dtype=jnp.float32)
    weight = 0.1 * jax.random.normal(kw, (C_out, C_in, KH, KW), dtype=jnp.float32)

    out = conv2d_activa_forward(x, weight, stride=stride, padding=padding,
                                dilation=dilation, activation="relu")
    out = jax.block_until_ready(out)

    # Apples-to-apples reference: same bf16 rounding of inputs, f32 accumulation.
    x_q = x.astype(jnp.bfloat16).astype(jnp.float32)
    w_q = weight.astype(jnp.bfloat16).astype(jnp.float32)
    ref = _reference_forward(x_q, w_q, stride=stride, padding=padding,
                             dilation=dilation)

    assert out.shape == (N, C_out, H, W), out.shape
    assert jnp.allclose(out, ref, atol=1e-3, rtol=1e-3), (
        float(jnp.max(jnp.abs(out - ref))))

    print("KERNEL_OK")
</pallas_src>

<mosaic_0001>
module attributes {stable_mosaic.version = 11 : i64} {
  func.func @_conv_relu_kernel(%arg0: i32, %arg1: memref<1x4x326xbf16, #tpu.memory_space<vmem>>, %arg2: memref<8x36xbf16, #tpu.memory_space<vmem>>, %arg3: memref<1x8x288xf32, #tpu.memory_space<vmem>>, %arg4: memref<36x288xbf16, #tpu.memory_space<vmem>>) attributes {dimension_semantics = [#tpu.dimension_semantics<parallel>], iteration_bounds = array<i64: 2>, scalar_prefetch = 0 : i64, scratch_operands = 1 : i64, tpu.core_type = #tpu.core_type<tc>, window_params = [{transform_indices = @transform_0, window_bounds = array<i64: 1, 4, 326>}, {pipeline_mode = #tpu.pipeline_mode<synchronous>, transform_indices = @transform_1, window_bounds = array<i64: 8, 36>}, {transform_indices = @transform_2, window_bounds = array<i64: 1, 8, 288>}]} {
    %c0 = arith.constant 0 : index
    %c0_0 = arith.constant 0 : index
    %c0_1 = arith.constant 0 : index
    %0 = vector.load %arg1[%c0, %c0_0, %c0_1] : memref<1x4x326xbf16, #tpu.memory_space<vmem>>, vector<1x4x288xbf16>
    %1 = vector.shape_cast %0 : vector<1x4x288xbf16> to vector<4x288xbf16>
    %c0_2 = arith.constant 0 : index
    %c0_3 = arith.constant 0 : index
    %2 = vector.load %arg4[%c0_2, %c0_3] : memref<36x288xbf16, #tpu.memory_space<vmem>>, vector<4x288xbf16>
    tpu.vector_store %arg4[%c0_2, %c0_3], %1 {strides = array<i32>} : memref<36x288xbf16, #tpu.memory_space<vmem>>, vector<4x288xbf16>,
    %c0_4 = arith.constant 0 : index
    %c0_5 = arith.constant 0 : index
    %c1 = arith.constant 1 : index
    %3 = vector.load %arg1[%c0_4, %c0_5, %c1] : memref<1x4x326xbf16, #tpu.memory_space<vmem>>, vector<1x4x288xbf16>
    %4 = vector.shape_cast %3 : vector<1x4x288xbf16> to vector<4x288xbf16>
    %c4 = arith.constant 4 : index
    %c0_6 = arith.constant 0 : index
    %5 = vector.load %arg4[%c4, %c0_6] : memref<36x288xbf16, #tpu.memory_space<vmem>>, vector<4x288xbf16>
    tpu.vector_store %arg4[%c4, %c0_6], %4 {strides = array<i32>} : memref<36x288xbf16, #tpu.memory_space<vmem>>, vector<4x288xbf16>,
    %c0_7 = arith.constant 0 : index
    %c0_8 = arith.constant 0 : index
    %c2 = arith.constant 2 : index
    %6 = vector.load %arg1[%c0_7, %c0_8, %c2] : memref<1x4x326xbf16, #tpu.memory_space<vmem>>, vector<1x4x288xbf16>
    %7 = vector.shape_cast %6 : vector<1x4x288xbf16> to vector<4x288xbf16>
    %c8 = arith.constant 8 : index
    %c0_9 = arith.constant 0 : index
    %8 = vector.load %arg4[%c8, %c0_9] : memref<36x288xbf16, #tpu.memory_space<vmem>>, vector<4x288xbf16>
    tpu.vector_store %arg4[%c8, %c0_9], %7 {strides = array<i32>} : memref<36x288xbf16, #tpu.memory_space<vmem>>, vector<4x288xbf16>,
    %c0_10 = arith.constant 0 : index
    %c0_11 = arith.constant 0 : index
    %c18 = arith.constant 18 : index
    %9 = vector.load %arg1[%c0_10, %c0_11, %c18] : memref<1x4x326xbf16, #tpu.memory_space<vmem>>, vector<1x4x288xbf16>
    %10 = vector.shape_cast %9 : vector<1x4x288xbf16> to vector<4x288xbf16>
    %c12 = arith.constant 12 : index
    %c0_12 = arith.constant 0 : index
    %11 = vector.load %arg4[%c12, %c0_12] : memref<36x288xbf16, #tpu.memory_space<vmem>>, vector<4x288xbf16>
    tpu.vector_store %arg4[%c12, %c0_12], %10 {strides = array<i32>} : memref<36x288xbf16, #tpu.memory_space<vmem>>, vector<4x288xbf16>,
    %c0_13 = arith.constant 0 : index
    %c0_14 = arith.constant 0 : index
    %c19 = arith.constant 19 : index
    %12 = vector.load %arg1[%c0_13, %c0_14, %c19] : memref<1x4x326xbf16, #tpu.memory_space<vmem>>, vector<1x4x288xbf16>
    %13 = vector.shape_cast %12 : vector<1x4x288xbf16> to vector<4x288xbf16>
    %c16 = arith.constant 16 : index
    %c0_15 = arith.constant 0 : index
    %14 = vector.load %arg4[%c16, %c0_15] : memref<36x288xbf16, #tpu.memory_space<vmem>>, vector<4x288xbf16>
    tpu.vector_store %arg4[%c16, %c0_15], %13 {strides = array<i32>} : memref<36x288xbf16, #tpu.memory_space<vmem>>, vector<4x288xbf16>,
    %c0_16 = arith.constant 0 : index
    %c0_17 = arith.constant 0 : index
    %c20 = arith.constant 20 : index
    %15 = vector.load %arg1[%c0_16, %c0_17, %c20] : memref<1x4x326xbf16, #tpu.memory_space<vmem>>, vector<1x4x288xbf16>
    %16 = vector.shape_cast %15 : vector<1x4x288xbf16> to vector<4x288xbf16>
    %c20_18 = arith.constant 20 : index
    %c0_19 = arith.constant 0 : index
    %17 = vector.load %arg4[%c20_18, %c0_19] : memref<36x288xbf16, #tpu.memory_space<vmem>>, vector<4x288xbf16>
    tpu.vector_store %arg4[%c20_18, %c0_19], %16 {strides = array<i32>} : memref<36x288xbf16, #tpu.memory_space<vmem>>, vector<4x288xbf16>,
    %c0_20 = arith.constant 0 : index
    %c0_21 = arith.constant 0 : index
    %c36 = arith.constant 36 : index
    %18 = vector.load %arg1[%c0_20, %c0_21, %c36] : memref<1x4x326xbf16, #tpu.memory_space<vmem>>, vector<1x4x288xbf16>
    %19 = vector.shape_cast %18 : vector<1x4x288xbf16> to vector<4x288xbf16>
    %c24 = arith.constant 24 : index
    %c0_22 = arith.constant 0 : index
    %20 = vector.load %arg4[%c24, %c0_22] : memref<36x288xbf16, #tpu.memory_space<vmem>>, vector<4x288xbf16>
    tpu.vector_store %arg4[%c24, %c0_22], %19 {strides = array<i32>} : memref<36x288xbf16, #tpu.memory_space<vmem>>, vector<4x288xbf16>,
    %c0_23 = arith.constant 0 : index
    %c0_24 = arith.constant 0 : index
    %c37 = arith.constant 37 : index
    %21 = vector.load %arg1[%c0_23, %c0_24, %c37] : memref<1x4x326xbf16, #tpu.memory_space<vmem>>, vector<1x4x288xbf16>
    %22 = vector.shape_cast %21 : vector<1x4x288xbf16> to vector<4x288xbf16>
    %c28 = arith.constant 28 : index
    %c0_25 = arith.constant 0 : index
    %23 = vector.load %arg4[%c28, %c0_25] : memref<36x288xbf16, #tpu.memory_space<vmem>>, vector<4x288xbf16>
    tpu.vector_store %arg4[%c28, %c0_25], %22 {strides = array<i32>} : memref<36x288xbf16, #tpu.memory_space<vmem>>, vector<4x288xbf16>,
    %c0_26 = arith.constant 0 : index
    %c0_27 = arith.constant 0 : index
    %c38 = arith.constant 38 : index
    %24 = vector.load %arg1[%c0_26, %c0_27, %c38] : memref<1x4x326xbf16, #tpu.memory_space<vmem>>, vector<1x4x288xbf16>
    %25 = vector.shape_cast %24 : vector<1x4x288xbf16> to vector<4x288xbf16>
    %c32 = arith.constant 32 : index
    %c0_28 = arith.constant 0 : index
    %26 = vector.load %arg4[%c32, %c0_28] : memref<36x288xbf16, #tpu.memory_space<vmem>>, vector<4x288xbf16>
    tpu.vector_store %arg4[%c32, %c0_28], %25 {strides = array<i32>} : memref<36x288xbf16, #tpu.memory_space<vmem>>, vector<4x288xbf16>,
    %c0_29 = arith.constant 0 : index
    %c0_30 = arith.constant 0 : index
    %27 = vector.load %arg2[%c0_29, %c0_30] : memref<8x36xbf16, #tpu.memory_space<vmem>>, vector<8x36xbf16>
    %c0_31 = arith.constant 0 : index
    %c0_32 = arith.constant 0 : index
    %28 = vector.load %arg4[%c0_31, %c0_32] : memref<36x288xbf16, #tpu.memory_space<vmem>>, vector<36x288xbf16>
    %cst = arith.constant dense<0.000000e+00> : vector<8x288xf32>
    %29 = tpu.matmul %27, %28, %cst {dimension_numbers = #tpu.dot_dimension_numbers<[1], [0], [0], [1], [0, 0, 1, 1], [], []>} : vector<8x36xbf16>, vector<36x288xbf16>, vector<8x288xf32> -> vector<8x288xf32>
    %cst_33 = arith.constant 0.000000e+00 : f32
    %30 = vector.broadcast %cst_33 : f32 to vector<8x288xf32>
    %31 = arith.maximumf %29, %30 : vector<8x288xf32>
    %c0_34 = arith.constant 0 : index
    %c0_35 = arith.constant 0 : index
    %c0_36 = arith.constant 0 : index
    %32 = vector.load %arg3[%c0_34, %c0_35, %c0_36] : memref<1x8x288xf32, #tpu.memory_space<vmem>>, vector<1x8x288xf32>
    %33 = vector.shape_cast %32 : vector<1x8x288xf32> to vector<8x288xf32>
    %34 = vector.shape_cast %31 : vector<8x288xf32> to vector<1x8x288xf32>
    tpu.vector_store %arg3[%c0_34, %c0_35, %c0_36], %34 {strides = array<i32>} : memref<1x8x288xf32, #tpu.memory_space<vmem>>, vector<1x8x288xf32>,
    return
  }
  func.func @transform_0(%arg0: i32) -> (i32, i32, i32) {
    %c0_i32 = arith.constant 0 : i32
    %c0_i32_0 = arith.constant 0 : i32
    %c0_i32_1 = arith.constant 0 : i32
    return %arg0, %c0_i32, %c0_i32_0 : i32, i32, i32
  }
  func.func @transform_1(%arg0: i32) -> (i32, i32) {
    %c0_i32 = arith.constant 0 : i32
    %c0_i32_0 = arith.constant 0 : i32
    %c0_i32_1 = arith.constant 0 : i32
    return %c0_i32, %c0_i32_0 : i32, i32
  }
  func.func @transform_2(%arg0: i32) -> (i32, i32, i32) {
    %c0_i32 = arith.constant 0 : i32
    %c0_i32_0 = arith.constant 0 : i32
    %c0_i32_1 = arith.constant 0 : i32
    return %arg0, %c0_i32, %c0_i32_0 : i32, i32, i32
  }
}

</mosaic_0001>

<llo_original>
// kernel: conv2d_activa_forward.1
$region0: #{conv2d_activa_forward.1}
  #allocation0 [shape = 'u32[]', space=smem, size = 0x4, offset = 0x4, fixed_abs, tag = 'smem constant byte address 0x4 - core index']
  #allocation1 [shape = 'u32[144,128]{1,0:T(1,128)}', space=vmem, size = 0x12000, scoped, tag = 'internal scratch']
  #allocation2 [shape = 'bf16[36,288]{1,0:T(8,128)(2,1)}', space=vmem, size = 0x7800, scoped, tag = 'scratch operand']
  %s0 = inlined_call_operand.vmem [shape: bf16[2,4,326], index: 0, kind: input, shape index: {}]
  %s1 = inlined_call_operand.vmem [shape: bf16[8,36], index: 1, kind: input, shape index: {}]
  %s2 = inlined_call_operand.vmem [shape: f32[2,8,288], index: 2, kind: output, shape index: {}]
  %s3 = sld [smem:[#allocation0]]
  $region41: #{conv2d_activa_forward.1} parent=0
    _
  %s5 = ssub.s32 1, %s3
  %s6 = scalar_select 0, %s5, %s3
  loop: start=0, step=1, limit=4
  $region2: #{conv2d_activa_forward.1} parent=0 // loop_pre_header
    _
  $region3: #{conv2d_activa_forward.1} parent=0 // loop_header
    %s8 = sphi 0, %s12
    %p9 = scmp.ge.s32.totalorder %s8, 4
    %s18 = sphi 0, %s20
    %s21 = sphi 0, %s18
    %s22 = sphi 0, %s21
    %s38 = sphi 0, %s22
    %s42 = sphi 0, %s42
    %s44 = sphi 0, %s42
    %s45 = sphi 0, %s44
    %s59 = sphi 0, %s45
    %s65 = sphi 0, %s67
    %s68 = sphi 0, %s65
    %s69 = sphi 0, %s68
    %s85 = sphi 0, %s69
  $region4: #{conv2d_activa_forward.1} parent=0 // loop_header_branch
    %11 = sbr.rel (%p9) target = $region8
  $region5: #{conv2d_activa_forward.1} parent=0 // loop_body
    %s13 = ssub.s32 %s8, 1
    %s14 = ssub.s32 %s8, 2
    %s15 = sadd.s32 %s8, 1
    %s16 = ssub.s32 %s8, %s15
    %p17 = scmp.eq.s32.totalorder %s16, 0
    %s19 = sadd.s32 %s18, 1
    %s20 = scalar_select %p17, %s18, %s19
    %p23 = pneg %p17
    %p24 = scmp.eq.s32.totalorder %s8, 1
    %p25 = por %p23, %p24
    %p26 = scmp.ne.s32.totalorder %s18, %s21
    %p27 = scmp.eq.s32.totalorder %s8, 0
    %p28 = por %p26, %p27
    %p29 = scmp.ne.s32.totalorder %s18, %s21
    %p30 = scmp.eq.s32.totalorder %s13, 1
    %p31 = por %p29, %p30
    %p32 = scmp.ne.s32.totalorder %s21, %s22
    %p33 = scmp.eq.s32.totalorder %s13, 0
    %p34 = por %p32, %p33
    %p35 = scmp.ne.s32.totalorder %s21, %s22
    %p36 = scmp.eq.s32.totalorder %s14, 1
    %p37 = por %p35, %p36
    %p39 = scmp.ne.s32.totalorder %s22, %s38
    %p40 = scmp.eq.s32.totalorder %s14, 0
    %p41 = por %p39, %p40
    %s43 = sadd.s32 %s42, 1
    %p46 = scmp.eq.s32.totalorder %s8, 1
    %p47 = scmp.ne.s32.totalorder %s42, %s44
    %p48 = scmp.eq.s32.totalorder %s8, 0
    %p49 = por %p47, %p48
    %p50 = scmp.ne.s32.totalorder %s42, %s44
    %p51 = scmp.eq.s32.totalorder %s13, 1
    %p52 = por %p50, %p51
    %p53 = scmp.ne.s32.totalorder %s44, %s45
    %p54 = scmp.eq.s32.totalorder %s13, 0
    %p55 = por %p53, %p54
    %p56 = scmp.ne.s32.totalorder %s44, %s45
    %p57 = scmp.eq.s32.totalorder %s14, 1
    %p58 = por %p56, %p57
    %p60 = scmp.ne.s32.totalorder %s45, %s59
    %p61 = scmp.eq.s32.totalorder %s14, 0
    %p62 = por %p60, %p61
    %s63 = ssub.s32 %s8, %s15
    %p64 = scmp.eq.s32.totalorder %s63, 0
    %s66 = sadd.s32 %s65, 1
    %s67 = scalar_select %p64, %s65, %s66
    %p70 = pneg %p64
    %p71 = scmp.eq.s32.totalorder %s8, 1
    %p72 = por %p70, %p71
    %p73 = scmp.ne.s32.totalorder %s65, %s68
    %p74 = scmp.eq.s32.totalorder %s8, 0
    %p75 = por %p73, %p74
    %p76 = scmp.ne.s32.totalorder %s65, %s68
    %p77 = scmp.eq.s32.totalorder %s13, 1
    %p78 = por %p76, %p77
    %p79 = scmp.ne.s32.totalorder %s68, %s69
    %p80 = scmp.eq.s32.totalorder %s13, 0
    %p81 = por %p79, %p80
    %p82 = scmp.ne.s32.totalorder %s68, %s69
    %p83 = scmp.eq.s32.totalorder %s14, 1
    %p84 = por %p82, %p83
    %p86 = scmp.ne.s32.totalorder %s69, %s85
    %p87 = scmp.eq.s32.totalorder %s14, 0
    %p88 = por %p86, %p87
    %p89 = scmp.le.s32.totalorder 1, %s8
    %p90 = scmp.lt.s32.totalorder %s8, 3
    %p91 = pnand %p89, %p90
    %p92 = pneg %p91
    // Predicated region
    $region9: #{conv2d_activa_forward.1} parent=5 // pred_check
      _
    $region10: #{conv2d_activa_forward.1} parent=5 // pred_check_branch
      %94 = sbr.rel (%p91) target = $region12
    $region11: #{conv2d_activa_forward.1} parent=5 // pred_region
      %s95 = ssub.s32 %s8, 1
      // Predicated region
      $region13: #{conv2d_activa_forward.1} parent=11 // pred_check
        %p96 = pneg %p55
      $region14: #{conv2d_activa_forward.1} parent=11 // pred_check_branch
        %98 = sbr.rel (%p96) target = $region16
      $region15: #{conv2d_activa_forward.1} parent=11 // pred_region
        _
      $region16: #{conv2d_activa_forward.1} parent=11 // pred_fallthru
        _
    $region12: #{conv2d_activa_forward.1} parent=5 // pred_fallthru
      _
    %p99 = scmp.lt.s32.totalorder %s8, 2
    // Predicated region
    $region17: #{conv2d_activa_forward.1} parent=5 // pred_check
      %p100 = pneg %p99
    $region18: #{conv2d_activa_forward.1} parent=5 // pred_check_branch
      %102 = sbr.rel (%p100) target = $region20
    $region19: #{conv2d_activa_forward.1} parent=5 // pred_region
      // Predicated region
      $region21: #{conv2d_activa_forward.1} parent=19 // pred_check
        %p103 = pneg %p28
      $region22: #{conv2d_activa_forward.1} parent=19 // pred_check_branch
        %105 = sbr.rel (%p103) target = $region24
      $region23: #{conv2d_activa_forward.1} parent=19 // pred_region
        %p106 = scmp.lt.s32.totalorder %s8, 1
        %s107 = scalar_select %p106, %s8, 1
        %s108 = smul.addr %s107, 3
        %s109 = smul.addr %s108, 2
        %s110 = scalar_lea.vmem %s0, %s109
      $region24: #{conv2d_activa_forward.1} parent=19 // pred_fallthru
        _
    $region20: #{conv2d_activa_forward.1} parent=5 // pred_fallthru
      _
    %p111 = scmp.le.s32.totalorder 1, %s8
    %p112 = scmp.lt.s32.totalorder %s8, 3
    %p113 = pnand %p111, %p112
    %p114 = pneg %p113
    // Predicated region
    $region25: #{conv2d_activa_forward.1} parent=5 // pred_check
      _
    $region26: #{conv2d_activa_forward.1} parent=5 // pred_check_branch
      %116 = sbr.rel (%p113) target = $region28
    $region27: #{conv2d_activa_forward.1} parent=5 // pred_region
      %s117 = ssub.s32 %s8, 1
      %p118 = scmp.lt.s32.totalorder %s13, 1
      %s119 = scalar_select %p118, %s13, 1
      %s120 = smul.addr %s119, 3
      %s121 = smul.addr %s120, 2
      %s122 = scalar_lea.vmem %s0, %s121
      %p123 = pneg %p34
      %p124 = pneg %p31
      %p125 = pneg %p55
      %p126 = pneg %p52
      %p127 = pneg %p81
      %p128 = pneg %p78
      %p129 = scmp.lt.s32.totalorder %s13, 1
      %s130 = scalar_select %p129, %s13, 1
      %s131 = smul.addr %s130, 3
      %s132 = smul.addr %s131, 8
      %s133 = scalar_lea.vmem %s2, %s132
      %p134 = scmp.lt.s32.totalorder %s13, 1
      %s135 = scalar_select %p134, %s13, 1
      %s136 = smul.addr %s135, 3
      %s137 = smul.addr %s136, 2
      %s138 = scalar_lea.vmem %s0, %s137
      %p139 = scmp.lt.s32.totalorder %s13, 1
      %s140 = scalar_select %p139, %s13, 1
      %s141 = smul.addr %s140, 3
      %s142 = smul.addr %s141, 8
      %s143 = scalar_lea.vmem %s2, %s142
      %v145 = vld [vmem:[%s138] sm:$0x3f]
      %v147 = vcombine.high %v145, %v145
      %v149 = vunpack.c.l.s4 1983009808
      %v150 = vunpack.c.0.s8 %v149
      %v151 = vlaneseq
      %v152 = vshrl.u32 %v151, 7
      %v153 = vsub.s32 %v150, %v152
      %v154 = vrot.slane %v145, %v153
      %v156 = vunpack.c.l.s4 1983009808
      %v157 = vunpack.c.0.s8 %v156
      %v158 = vlaneseq
      %v159 = vshrl.u32 %v158, 7
      %v160 = vsub.s32 %v157, %v159
      %v161 = vrot.slane %v147, %v160
      %164 = vst [vmem:[#allocation2] sm:$0x33] %v154
      %vm165 = vcmask 254976
      %166 = vst.msk [vmem:[#allocation2 + $0x8] sm:$0x3] %vm165, %v161
      %v167 = vld [vmem:[%s138] sm:$0x3f]
      %v169 = vcombine.low %v167, %v167
      %v171 = vunpack.c.l.s4 1983009808
      %v172 = vunpack.c.0.s8 %v171
      %v173 = vlaneseq
      %v174 = vshrl.u32 %v173, 7
      %v175 = vsub.s32 %v172, %v174
      %v176 = vrot.slane %v169, %v175
      %v178 = vunpack.c.l.s4 1983009808
      %v179 = vunpack.c.0.s8 %v178
      %v180 = vlaneseq
      %v181 = vshrl.u32 %v180, 7
      %v182 = vsub.s32 %v179, %v181
      %v183 = vrot.slane %v167, %v182
      %184 = vrot.lane.b32.xlu0 %v176, 127
      %v185 = vpop.permute.xlu0 %184
      %186 = vrot.lane.b32.xlu0 %v183, 127
      %v187 = vpop.permute.xlu0 %186
      %v188 = vrot.slane %v185, 4
      %v189 = vrot.slane %v187, 4
      %vm190 = vcmask 1043456
      %v191 = vsel %vm190, %v188, %v189
      %vm192 = vcmask 1039360
      %v193 = vsel %vm192, %v185, %v191
      %196 = vst [vmem:[#allocation2] sm:$0xcc] %v193
      %vm197 = vcmask 257026
      %198 = vst.msk [vmem:[#allocation2 + $0x8] sm:$0xc] %vm197, %v187
      %v199 = vld [vmem:[%s138] sm:$0x3f]
      %v201 = vcombine.high %v199, %v199
      %v203 = vunpack.c.l.s4 1983009808
      %v204 = vunpack.c.0.s8 %v203
      %v205 = vlaneseq
      %v206 = vshrl.u32 %v205, 7
      %v207 = vsub.s32 %v204, %v206
      %v208 = vrot.slane %v199, %v207
      %v210 = vunpack.c.l.s4 1983009808
      %v211 = vunpack.c.0.s8 %v210
      %v212 = vlaneseq
      %v213 = vshrl.u32 %v212, 7
      %v214 = vsub.s32 %v211, %v213
      %v215 = vrot.slane %v201, %v214
      %216 = vrot.lane.b32.xlu0 %v208, 126
      %v217 = vpop.permute.xlu0 %216
      %218 = vrot.lane.b32.xlu0 %v215, 126
      %v219 = vpop.permute.xlu0 %218
      %v220 = vrot.slane %v217, 4
      %v221 = vrot.slane %v219, 4
      %v222 = vsel %vm190, %v220, %v221
      %vm223 = vcmask 1031168
      %v224 = vsel %vm223, %v217, %v222
      %227 = vst [vmem:[#allocation2 + $0xc] sm:$0x33] %v224
      %228 = vst.msk [vmem:[#allocation2 + $0x14] sm:$0x3] %vm165, %v219
      %v229 = vld [vmem:[%s138] sm:$0x3f]
      %v231 = vcombine.low %v229, %v229
      %v233 = vunpack.c.l.s4 1983009808
      %v234 = vunpack.c.0.s8 %v233
      %v235 = vlaneseq
      %v236 = vshrl.u32 %v235, 7
      %v237 = vsub.s32 %v234, %v236
      %v238 = vrot.slane %v231, %v237
      %v240 = vunpack.c.l.s4 1983009808
      %v241 = vunpack.c.0.s8 %v240
      %v242 = vlaneseq
      %v243 = vshrl.u32 %v242, 7
      %v244 = vsub.s32 %v241, %v243
      %v245 = vrot.slane %v229, %v244
      %246 = vrot.lane.b32.xlu0 %v238, 110
      %v247 = vpop.permute.xlu0 %246
      %248 = vrot.lane.b32.xlu0 %v245, 110
      %v249 = vpop.permute.xlu0 %248
      %v250 = vrot.slane %v247, 4
      %v251 = vrot.slane %v249, 4
      %v252 = vsel %vm190, %v250, %v251
      %vm253 = vcmask 900096
      %v254 = vsel %vm253, %v247, %v252
      %257 = vst [vmem:[#allocation2 + $0xc] sm:$0xcc] %v254
      %258 = vst.msk [vmem:[#allocation2 + $0x14] sm:$0xc] %vm197, %v249
      %v259 = vld [vmem:[%s138] sm:$0x3f]
      %v261 = vcombine.high %v259, %v259
      %v263 = vunpack.c.l.s4 1983009808
      %v264 = vunpack.c.0.s8 %v263
      %v265 = vlaneseq
      %v266 = vshrl.u32 %v265, 7
      %v267 = vsub.s32 %v264, %v266
      %v268 = vrot.slane %v259, %v267
      %v270 = vunpack.c.l.s4 1983009808
      %v271 = vunpack.c.0.s8 %v270
      %v272 = vlaneseq
      %v273 = vshrl.u32 %v272, 7
      %v274 = vsub.s32 %v271, %v273
      %v275 = vrot.slane %v261, %v274
      %276 = vrot.lane.b32.xlu0 %v268, 109
      %v277 = vpop.permute.xlu0 %276
      %278 = vrot.lane.b32.xlu0 %v275, 109
      %v279 = vpop.permute.xlu0 %278
      %v280 = vrot.slane %v277, 4
      %v281 = vrot.slane %v279, 4
      %v282 = vsel %vm190, %v280, %v281
      %vm283 = vcmask 891904
      %v284 = vsel %vm283, %v277, %v282
      %287 = vst [vmem:[#allocation2 + $0x18] sm:$0x33] %v284
      %288 = vst.msk [vmem:[#allocation2 + $0x20] sm:$0x3] %vm165, %v279
      %v289 = vld [vmem:[%s138] sm:$0x3f]
      %v291 = vcombine.low %v289, %v289
      %v293 = vunpack.c.l.s4 1983009808
      %v294 = vunpack.c.0.s8 %v293
      %v295 = vlaneseq
      %v296 = vshrl.u32 %v295, 7
      %v297 = vsub.s32 %v294, %v296
      %v298 = vrot.slane %v291, %v297
      %v300 = vunpack.c.l.s4 1983009808
      %v301 = vunpack.c.0.s8 %v300
      %v302 = vlaneseq
      %v303 = vshrl.u32 %v302, 7
      %v304 = vsub.s32 %v301, %v303
      %v305 = vrot.slane %v289, %v304
      %306 = vrot.lane.b32.xlu0 %v298, 108
      %v307 = vpop.permute.xlu0 %306
      %308 = vrot.lane.b32.xlu0 %v305, 108
      %v309 = vpop.permute.xlu0 %308
      %v310 = vrot.slane %v307, 4
      %v311 = vrot.slane %v309, 4
      %v312 = vsel %vm190, %v310, %v311
      %vm313 = vcmask 883712
      %v314 = vsel %vm313, %v307, %v312
      %317 = vst [vmem:[#allocation2 + $0x18] sm:$0xcc] %v314
      %318 = vst.msk [vmem:[#allocation2 + $0x20] sm:$0xc] %vm197, %v309
      %v319 = vld [vmem:[%s138] sm:$0x3f]
      %v321 = vcombine.high %v319, %v319
      %v323 = vunpack.c.l.s4 1983009808
      %v324 = vunpack.c.0.s8 %v323
      %v325 = vlaneseq
      %v326 = vshrl.u32 %v325, 7
      %v327 = vsub.s32 %v324, %v326
      %v328 = vrot.slane %v319, %v327
      %v330 = vunpack.c.l.s4 1983009808
      %v331 = vunpack.c.0.s8 %v330
      %v332 = vlaneseq
      %v333 = vshrl.u32 %v332, 7
      %v334 = vsub.s32 %v331, %v333
      %v335 = vrot.slane %v321, %v334
      %336 = vrot.lane.b32.xlu0 %v328, 92
      %v337 = vpop.permute.xlu0 %336
      %338 = vrot.lane.b32.xlu0 %v335, 92
      %v339 = vpop.permute.xlu0 %338
      %v340 = vrot.slane %v337, 4
      %v341 = vrot.slane %v339, 4
      %v342 = vsel %vm190, %v340, %v341
      %vm343 = vcmask 752640
      %v344 = vsel %vm343, %v337, %v342
      %347 = vst [vmem:[#allocation2 + $0x24] sm:$0x33] %v344
      %348 = vst.msk [vmem:[#allocation2 + $0x2c] sm:$0x3] %vm165, %v339
      %v349 = vld [vmem:[%s138] sm:$0x3f]
      %v351 = vcombine.low %v349, %v349
      %v353 = vunpack.c.l.s4 1983009808
      %v354 = vunpack.c.0.s8 %v353
      %v355 = vlaneseq
      %v356 = vshrl.u32 %v355, 7
      %v357 = vsub.s32 %v354, %v356
      %v358 = vrot.slane %v351, %v357
      %v360 = vunpack.c.l.s4 1983009808
      %v361 = vunpack.c.0.s8 %v360
      %v362 = vlaneseq
      %v363 = vshrl.u32 %v362, 7
      %v364 = vsub.s32 %v361, %v363
      %v365 = vrot.slane %v349, %v364
      %366 = vrot.lane.b32.xlu0 %v358, 91
      %v367 = vpop.permute.xlu0 %366
      %368 = vrot.lane.b32.xlu0 %v365, 91
      %v369 = vpop.permute.xlu0 %368
      %v370 = vrot.slane %v367, 4
      %v371 = vrot.slane %v369, 4
      %v372 = vsel %vm190, %v370, %v371
      %vm373 = vcmask 744448
      %v374 = vsel %vm373, %v367, %v372
      %377 = vst [vmem:[#allocation2 + $0x24] sm:$0xcc] %v374
      %378 = vst.msk [vmem:[#allocation2 + $0x2c] sm:$0xc] %vm197, %v369
      %v379 = vld [vmem:[%s138] sm:$0x3f]
      %v381 = vcombine.high %v379, %v379
      %v383 = vunpack.c.l.s4 1983009808
      %v384 = vunpack.c.0.s8 %v383
      %v385 = vlaneseq
      %v386 = vshrl.u32 %v385, 7
      %v387 = vsub.s32 %v384, %v386
      %v388 = vrot.slane %v379, %v387
      %v390 = vunpack.c.l.s4 1983009808
      %v391 = vunpack.c.0.s8 %v390
      %v392 = vlaneseq
      %v393 = vshrl.u32 %v392, 7
      %v394 = vsub.s32 %v391, %v393
      %v395 = vrot.slane %v381, %v394
      %396 = vrot.lane.b32.xlu0 %v388, 90
      %v397 = vpop.permute.xlu0 %396
      %398 = vrot.lane.b32.xlu0 %v395, 90
      %v399 = vpop.permute.xlu0 %398
      %v400 = vrot.slane %v397, 4
      %v401 = vrot.slane %v399, 4
      %v402 = vsel %vm190, %v400, %v401
      %vm403 = vcmask 736256
      %v404 = vsel %vm403, %v397, %v402
      %407 = vst [vmem:[#allocation2 + $0x30] sm:$0x33] %v404
      %408 = vst.msk [vmem:[#allocation2 + $0x38] sm:$0x3] %vm165, %v399
      %v409 = vld [vmem:[%s1] sm:$0xf]
      %v410 = vld [vmem:[#allocation2] sm:$0xff]
      %v411 = vld [vmem:[#allocation2 + $0x8] sm:$0xf]
      %v412 = vld [vmem:[#allocation2 + $0xc] sm:$0xff]
      %v413 = vld [vmem:[#allocation2 + $0x14] sm:$0xf]
      %v414 = vld [vmem:[#allocation2 + $0x18] sm:$0xff]
      %v415 = vld [vmem:[#allocation2 + $0x20] sm:$0xf]
      %v416 = vld [vmem:[#allocation2 + $0x24] sm:$0xff]
      %v417 = vld [vmem:[#allocation2 + $0x2c] sm:$0xf]
      %v418 = vld [vmem:[#allocation2 + $0x30] sm:$0x33]
      %v419 = vld [vmem:[#allocation2 + $0x38] sm:$0x3]
      %v430 = vunpack.c.l.b16 %v410
      %v431 = vunpack.c.h.b16 %v410
      %v432 = vunpack.c.l.b16 %v411
      %v433 = vunpack.c.l.b16 %v412
      %v434 = vunpack.c.h.b16 %v412
      %v435 = vunpack.c.l.b16 %v413
      %v436 = vunpack.c.l.b16 %v414
      %v437 = vunpack.c.h.b16 %v414
      %v438 = vunpack.c.l.b16 %v415
      %v439 = vunpack.c.l.b16 %v416
      %v440 = vunpack.c.h.b16 %v416
      %v441 = vunpack.c.l.b16 %v417
      %v442 = vunpack.c.l.b16 %v418
      %v443 = vunpack.c.h.b16 %v418
      %v444 = vunpack.c.l.b16 %v419
      %v445 = vpack.c.b16 %v433, %v430
      %v446 = vpack.c.b16 %v434, %v431
      %v447 = vpack.c.b16 %v435, %v432
      %v448 = vpack.c.b16 %v439, %v436
      %v449 = vpack.c.b16 %v440, %v437
      %v450 = vpack.c.b16 %v441, %v438
      %v451 = vpack.c.b16 %v442, %v442
      %v452 = vpack.c.b16 %v443, %v443
      %v453 = vpack.c.b16 %v444, %v444
      %vm460 = vcmask 293888
      %v462 = vsel %vm460, %v409, 0
      %vm464 = vcmask 1041408
      %v466 = vsel %vm464, %v451, 0
      %v469 = vsel %vm464, %v452, 0
      %v472 = vsel %vm464, %v453, 0
      %474 = vmatprep.subr.bf16.mxu0 %v446
      %475 = vmatpush1.bf16.msra.mxu0 %v445
      %476 = vmatprep.subr.bf16.mxu0 %v449
      %477 = vmatpush1.bf16.msra.mxu0 %v448
      %478 = vmatprep.subr.bf16.mxu0 %v469
      %479 = vmatpush1.bf16.msra.mxu0 %v466
      %480 = vmatprep.subr.bf16.mxu0 0
      %481 = vmatpush1.bf16.msra.mxu0 0
      %482 = vmatprep.subr.bf16.mxu0 0
      %483 = vmatpush1.bf16.msra.mxu0 0
      %484 = vmatprep.subr.bf16.mxu0 0
      %485 = vmatpush1.bf16.msra.mxu0 0
      %486 = vmatprep.subr.bf16.mxu0 0
      %487 = vmatpush1.bf16.msra.mxu0 0
      %488 = vmatprep.subr.bf16.mxu0 0
      %489 = vmatpush1.bf16.msra.mxu0 0
      %490 = vmatprep.subr.bf16.mxu0 0
      %491 = vmatpush1.bf16.msra.mxu0 0
      %492 = vmatprep.subr.bf16.mxu0 0
      %493 = vmatpush1.bf16.msra.mxu0 0
      %494 = vmatprep.subr.bf16.mxu0 0
      %495 = vmatpush1.bf16.msra.mxu0 0
      %496 = vmatprep.subr.bf16.mxu0 0
      %497 = vmatpush1.bf16.msra.mxu0 0
      %498 = vmatprep.subr.bf16.mxu0 0
      %499 = vmatpush1.bf16.msra.mxu0 0
      %500 = vmatprep.subr.bf16.mxu0 0
      %501 = vmatpush1.bf16.msra.mxu0 0
      %502 = vmatprep.subr.bf16.mxu0 0
      %503 = vmatpush1.bf16.msra.mxu0 0
      %504 = vmatprep.subr.bf16.mxu0 0
      %505 = vmatpush1.bf16.msra.mxu0 0
      %506 = vmatprep.mubr.bf16.mxu0 0
      %507 = vmatmul.mubr.bf16.gmra.mrb[0].mxu0 %v462
      %v508 = vpop.f32.mrb[0].mxu0
      %v509 = vadd.f32 0.0, %v508
      %v510 = vpop.f32.mrb[0].mxu0
      %v511 = vadd.f32 0.0, %v510
      %v512 = vpop.f32.mrb[0].mxu0
      %v513 = vpop.f32.mrb[0].mxu0
      %514 = vdwg.mxu0
      %515 = vmatprep.subr.bf16.mxu0 0
      %516 = vmatpush1.bf16.msra.mxu0 %v447
      %517 = vmatprep.subr.bf16.mxu0 0
      %518 = vmatpush1.bf16.msra.mxu0 %v450
      %519 = vmatprep.subr.bf16.mxu0 0
      %520 = vmatpush1.bf16.msra.mxu0 %v472
      %521 = vmatprep.subr.bf16.mxu0 0
      %522 = vmatpush1.bf16.msra.mxu0 0
      %523 = vmatprep.subr.bf16.mxu0 0
      %524 = vmatpush1.bf16.msra.mxu0 0
      %525 = vmatprep.subr.bf16.mxu0 0
      %526 = vmatpush1.bf16.msra.mxu0 0
      %527 = vmatprep.subr.bf16.mxu0 0
      %528 = vmatpush1.bf16.msra.mxu0 0
      %529 = vmatprep.subr.bf16.mxu0 0
      %530 = vmatpush1.bf16.msra.mxu0 0
      %531 = vmatprep.subr.bf16.mxu0 0
      %532 = vmatpush1.bf16.msra.mxu0 0
      %533 = vmatprep.subr.bf16.mxu0 0
      %534 = vmatpush1.bf16.msra.mxu0 0
      %535 = vmatprep.subr.bf16.mxu0 0
      %536 = vmatpush1.bf16.msra.mxu0 0
      %537 = vmatprep.subr.bf16.mxu0 0
      %538 = vmatpush1.bf16.msra.mxu0 0
      %539 = vmatprep.subr.bf16.mxu0 0
      %540 = vmatpush1.bf16.msra.mxu0 0
      %541 = vmatprep.subr.bf16.mxu0 0
      %542 = vmatpush1.bf16.msra.mxu0 0
      %543 = vmatprep.subr.bf16.mxu0 0
      %544 = vmatpush1.bf16.msra.mxu0 0
      %545 = vmatprep.subr.bf16.mxu0 0
      %546 = vmatpush1.bf16.msra.mxu0 0
      %547 = vmatprep.mubr.bf16.mxu0 0
      %548 = vmatmul.mubr.bf16.gmra.mrb[0].mxu0 %v462
      %v549 = vpop.f32.mrb[0].mxu0
      %v550 = vadd.f32 0.0, %v549
      %v551 = vpop.f32.mrb[0].mxu0
      %v552 = vpop.f32.mrb[0].mxu0
      %v553 = vpop.f32.mrb[0].mxu0
      %554 = vdwg.mxu0
      %v555 = vmax.f32 %v509, 0.0
      %v556 = vmax.f32 %v511, 0.0
      %v557 = vmax.f32 %v550, 0.0
      %558 = vst [vmem:[%s143] sm:$0xff] %v555
      %559 = vst [vmem:[%s143 + $0x8] sm:$0xff] %v556
      %vm560 = vcmask 261120
      %561 = vst.msk [vmem:[%s143 + $0x10] sm:$0xff] %vm560, %v557
      %p562 = scmp.lt.s32.totalorder %s13, 1
      %s563 = scalar_select %p562, %s13, 1
      %s564 = smul.addr %s563, 3
      %s565 = smul.addr %s564, 8
      %s566 = scalar_lea.vmem %s2, %s565
      // Predicated region
      $region29: #{conv2d_activa_forward.1} parent=27 // pred_check
        %p567 = pneg %p78
      $region30: #{conv2d_activa_forward.1} parent=27 // pred_check_branch
        %569 = sbr.rel (%p567) target = $region32
      $region31: #{conv2d_activa_forward.1} parent=27 // pred_region
        _
      $region32: #{conv2d_activa_forward.1} parent=27 // pred_fallthru
        _
    $region28: #{conv2d_activa_forward.1} parent=5 // pred_fallthru
      _
    %p570 = scmp.le.s32.totalorder 2, %s8
    // Predicated region
    $region33: #{conv2d_activa_forward.1} parent=5 // pred_check
      %p571 = pneg %p570
    $region34: #{conv2d_activa_forward.1} parent=5 // pred_check_branch
      %573 = sbr.rel (%p571) target = $region36
    $region35: #{conv2d_activa_forward.1} parent=5 // pred_region
      %s574 = ssub.s32 %s8, 2
      // Predicated region
      $region37: #{conv2d_activa_forward.1} parent=35 // pred_check
        %p575 = pneg %p84
      $region38: #{conv2d_activa_forward.1} parent=35 // pred_check_branch
        %577 = sbr.rel (%p575) target = $region40
      $region39: #{conv2d_activa_forward.1} parent=35 // pred_region
        %p578 = scmp.lt.s32.totalorder %s14, 1
        %s579 = scalar_select %p578, %s14, 1
        %s580 = smul.addr %s579, 3
        %s581 = smul.addr %s580, 8
        %s582 = scalar_lea.vmem %s2, %s581
      $region40: #{conv2d_activa_forward.1} parent=35 // pred_fallthru
        _
    $region36: #{conv2d_activa_forward.1} parent=5 // pred_fallthru
      _
  $region6: #{conv2d_activa_forward.1} parent=0 // loop_footer
    %s12 = sadd.s32 1, %s8
  $region7: #{conv2d_activa_forward.1} parent=0 // loop_footer_branch
    %7 = sbr.rel target = $region3
  $region8: #{conv2d_activa_forward.1} parent=0 // loop_exit
    _

</llo_original>
